<compile_context>
chip_gen: v5e
topology: v5e:2x2
jax: 0.10.0
libtpu: 0.0.40
codegen_flags: <defaults>
</compile_context>

<pallas_src>
import jax
import jax.numpy as jnp
from jax import lax
from jax.experimental import pallas as pl
from jax.experimental.pallas import tpu as pltpu


# ---------------------------------------------------------------------------
# Wrapper-side parameter transforms (plain JAX, run once per call / under jit)
# ---------------------------------------------------------------------------

def _block_circulant_width(w_w):
    """[2,2,1,W] conv weight -> [2W, 2W] block-circulant (right-multiply form).

    Mw[ci*W + j, co*W + w_out] = w_w[co, ci, 0, (j - w_out) % W]
    so that Q = P @ Mw implements the circular width conv with the 2x2 channel
    mixing fused into a single MXU matmul.
    """
    W = w_w.shape[-1]
    j = jnp.arange(W)[:, None]
    w_out = jnp.arange(W)[None, :]
    idx = (j - w_out) % W                           # [W, W]
    circ = w_w[:, :, 0, :][:, :, idx]               # [co, ci, j, w_out]
    return jnp.transpose(circ, (1, 2, 0, 3)).reshape(2 * W, 2 * W)


def _block_circulant_height_T(w_h):
    """[2,2,H,1] conv weight -> [2H, 2H] block-circulant (right-multiply form).

    MhT[ci*H + i, co*H + h_out] = w_h[co, ci, (i - h_out) % H, 0]
    so that R = Ph @ MhT (Ph rows = (b, w), cols = (ci, i)) implements the
    circular height conv with channel mixing fused.
    """
    H = w_h.shape[2]
    i = jnp.arange(H)[:, None]
    h_out = jnp.arange(H)[None, :]
    idx = (i - h_out) % H                           # [H, H]
    circ = w_h[:, :, :, 0][:, :, idx]               # [co, ci, i, h_out]
    return jnp.transpose(circ, (1, 2, 0, 3)).reshape(2 * H, 2 * H)


def _final_height_matrix_T(w_h, w_f):
    """Fold the final 1x1 conv into the 2nd-iteration height circulant.

    Mf[ci*H + i, h_out] = sum_co w_f[co] * w_h[co, ci, (i - h_out) % H, 0]
    """
    H = w_h.shape[2]
    i = jnp.arange(H)[:, None]
    h_out = jnp.arange(H)[None, :]
    idx = (i - h_out) % H
    circ = w_h[:, :, :, 0][:, :, idx]               # [co, ci, i, h_out]
    wf = w_f.reshape(2)
    mixed = jnp.tensordot(wf, circ, axes=([0], [0]))  # [ci, i, h_out]
    return mixed.reshape(2 * H, H)


# ---------------------------------------------------------------------------
# Kernel
# ---------------------------------------------------------------------------

def _twod_conv_sum_kernel(bf_ref, x_ref, mw_ref, mh_ref, mhf_ref, bw_ref, bh_ref,
                          o_ref):
    """One grid step: Bt images -> Bt [H, W] attention maps.

    x_ref  : (Bt, C, H, W) VMEM input tile
    mw_ref : (2W, 2W)  block-circulant width-conv matrix (right-multiply)
    mh_ref : (2H, 2H)  block-circulant height-conv matrix (right-multiply)
    mhf_ref: (2H, H)   height circulant with the final 1x1 conv folded in
    bw_ref : (1, 2W)   width-conv bias row   (b_w[co] repeated W times)
    bh_ref : (1, 2H)   height-conv bias row  (b_h[co] repeated H times)
    bf_ref : (1,) SMEM folded final bias     (wf . b_h + b_f)
    o_ref  : (Bt, H, W) output tile
    """
    Bt, C, H, W = x_ref.shape

    # ---- Channel pooling: single pass over C, straight from the ref -------
    x0 = x_ref[:, 0].astype(jnp.float32)            # [Bt, H, W]
    p_max = x0
    p_sum = x0
    for ci in range(1, C):                          # C is static -> unrolled
        xc = x_ref[:, ci].astype(jnp.float32)
        p_max = jnp.maximum(p_max, xc)
        p_sum = p_sum + xc
    p_mean = p_sum * (1.0 / C)                      # mean via constant reciprocal

    mw = mw_ref[...]
    mh = mh_ref[...]
    mhf = mhf_ref[...]
    bw = bw_ref[...]                                # (1, 2W) -> broadcast over rows
    bh = bh_ref[...]                                # (1, 2H)
    mat_dt = mw.dtype                               # f32 (or bf16 fast path)

    # Width layout: rows (b, h), lanes (channel, w)  -> [Bt*H, 2W]
    pw = jnp.concatenate([p_max, p_mean], axis=-1).reshape(Bt * H, 2 * W)

    def width_then_to_height_layout(p):
        # Circular width conv + channel mixing as ONE MXU matmul.
        q = jnp.dot(p.astype(mat_dt), mw, preferred_element_type=jnp.float32) + bw
        # Re-layout for the height conv: rows (b, w), lanes (channel, h).
        q3 = q.reshape(Bt, H, 2 * W)
        q0t = jnp.swapaxes(q3[:, :, :W], 1, 2)      # [Bt, W, H]  (channel 0)
        q1t = jnp.swapaxes(q3[:, :, W:], 1, 2)      # [Bt, W, H]  (channel 1)
        return jnp.concatenate([q0t, q1t], axis=-1).reshape(Bt * W, 2 * H)

    # ---- Iteration 1: width conv, height conv ------------------------------
    ph = width_then_to_height_layout(pw)
    r = jnp.dot(ph.astype(mat_dt), mh, preferred_element_type=jnp.float32) + bh
    # Back to width layout for iteration 2.
    r3 = r.reshape(Bt, W, 2 * H)
    r0t = jnp.swapaxes(r3[:, :, :H], 1, 2)          # [Bt, H, W]
    r1t = jnp.swapaxes(r3[:, :, H:], 1, 2)          # [Bt, H, W]
    pw = jnp.concatenate([r0t, r1t], axis=-1).reshape(Bt * H, 2 * W)

    # ---- Iteration 2: width conv, height conv fused with the final 1x1 -----
    ph = width_then_to_height_layout(pw)
    z = jnp.dot(ph.astype(mat_dt), mhf, preferred_element_type=jnp.float32) + bf_ref[0]
    # Sigmoid: exp + approximate reciprocal, both on the (otherwise idle) EUP.
    s = pl.reciprocal(1.0 + jnp.exp(-z), approx=True)       # [Bt*W, H]
    o_ref[...] = jnp.swapaxes(s.reshape(Bt, W, H), 1, 2).astype(o_ref.dtype)


# ---------------------------------------------------------------------------
# Wrapper
# ---------------------------------------------------------------------------

def _pick_batch_tile(batch, height, target_rows=256):
    """Largest divisor Bt of `batch` with Bt*height >= ~target_rows, then reduced
    (if possible) so the batch grid keeps >=2 steps for v7x's two TensorCores."""
    want = max(1, -(-target_rows // height))        # ceil(target_rows / height)
    bt = 1
    for d in range(1, batch + 1):
        if batch % d == 0 and d <= want:
            bt = d
    if batch // bt < 2:                             # keep both TCs busy on v7x
        for d in range(bt - 1, 0, -1):
            if batch % d == 0 and batch // d >= 2:
                bt = d
                break
    return bt


def twod_conv_sum(x, w_w, b_w, w_h, b_h, w_f, b_f, *, matmul_dtype=jnp.float32):
    """Fused forward of twodConvSum.

    x: [B, C, H, W]; w_w: [2,2,1,W]; b_w: [2]; w_h: [2,2,H,1]; b_h: [2];
    w_f: [1,2,1,1]; b_f: [1].  Returns [B, 1, H, W].

    matmul_dtype=jnp.bfloat16 is the v6e/v7x fast path (native bf16 MXU, half
    the circulant VMEM); keep f32 when validating against an f32 reference.
    """
    B, C, H, W = x.shape
    Bt = _pick_batch_tile(B, H)
    grid = (B // Bt,)

    # --- Parameter transform: block circulants + folded final conv ----------
    mw_blk = _block_circulant_width(w_w).astype(matmul_dtype)        # [2W, 2W]
    mh_blk = _block_circulant_height_T(w_h).astype(matmul_dtype)     # [2H, 2H]
    mhf_blk = _final_height_matrix_T(w_h, w_f).astype(matmul_dtype)  # [2H, H]
    bw_row = jnp.repeat(b_w.astype(jnp.float32), W).reshape(1, 2 * W)
    bh_row = jnp.repeat(b_h.astype(jnp.float32), H).reshape(1, 2 * H)
    wf = w_f.reshape(2).astype(jnp.float32)
    b_final = (wf[0] * b_h[0] + wf[1] * b_h[1] + b_f[0]).astype(jnp.float32).reshape(1)

    # --- VMEM budget: double-buffered blocks + weights, with headroom -------
    w_item = jnp.dtype(matmul_dtype).itemsize
    block_bytes = (
        2 * Bt * C * H * W * x.dtype.itemsize            # x tile (double-buffered)
        + 2 * Bt * H * W * x.dtype.itemsize              # output tile
        + 2 * (mw_blk.size + mh_blk.size + mhf_blk.size) * w_item
        + 2 * (bw_row.size + bh_row.size) * 4
    )
    vmem_limit = int(min(96 * 2 ** 20, max(32 * 2 ** 20, 4 * block_bytes)))

    # --- Advisory cost estimate so XLA schedules the custom call sensibly ---
    flops = B * (16 * H * W * W + 12 * W * H * H + 2 * C * H * W + 10 * H * W)
    bytes_accessed = (x.size * x.dtype.itemsize + B * H * W * x.dtype.itemsize
                      + grid[0] * (mw_blk.size + mh_blk.size + mhf_blk.size) * w_item)

    out = pl.pallas_call(
        _twod_conv_sum_kernel,
        out_shape=jax.ShapeDtypeStruct((B, H, W), x.dtype),
        grid_spec=pl.GridSpec(
            grid=grid,
            in_specs=[
                pl.BlockSpec(memory_space=pltpu.SMEM),                 # b_final (1,)
                pl.BlockSpec((Bt, C, H, W), lambda b: (b, 0, 0, 0)),   # x batch tile
                pl.BlockSpec((2 * W, 2 * W), lambda b: (0, 0)),        # width circulant
                pl.BlockSpec((2 * H, 2 * H), lambda b: (0, 0)),        # height circulant
                pl.BlockSpec((2 * H, H), lambda b: (0, 0)),            # folded final circulant
                pl.BlockSpec((1, 2 * W), lambda b: (0, 0)),            # width bias row
                pl.BlockSpec((1, 2 * H), lambda b: (0, 0)),            # height bias row
            ],
            out_specs=pl.BlockSpec((Bt, H, W), lambda b: (b, 0, 0)),
        ),
        compiler_params=pltpu.CompilerParams(
            dimension_semantics=("parallel",),   # batch grid -> both TCs on v7x
            vmem_limit_bytes=vmem_limit,
        ),
        cost_estimate=pl.CostEstimate(
            flops=int(flops),
            transcendentals=int(2 * B * H * W),
            bytes_accessed=int(bytes_accessed),
        ),
    )(b_final, x, mw_blk, mh_blk, mhf_blk, bw_row, bh_row)
    return out.reshape(B, 1, H, W)


# ---------------------------------------------------------------------------
# Reference + test
# ---------------------------------------------------------------------------

def _reference_forward(x, w_w, b_w, w_h, b_h, w_f, b_f):
    """Plain-JAX reference matching the PyTorch module exactly."""
    dn = ("NCHW", "OIHW", "NCHW")
    p = jnp.concatenate([jnp.max(x, axis=1, keepdims=True),
                         jnp.mean(x, axis=1, keepdims=True)], axis=1)
    for _ in range(2):
        pw = jnp.concatenate([p, p[:, :, :, :-1]], axis=3)
        p = lax.conv_general_dilated(pw, w_w, (1, 1), "VALID",
                                     dimension_numbers=dn,
                                     precision=lax.Precision.HIGHEST)
        p = p + b_w.reshape(1, 2, 1, 1)
        ph = jnp.concatenate([p, p[:, :, :-1, :]], axis=2)
        p = lax.conv_general_dilated(ph, w_h, (1, 1), "VALID",
                                     dimension_numbers=dn,
                                     precision=lax.Precision.HIGHEST)
        p = p + b_h.reshape(1, 2, 1, 1)
    p = lax.conv_general_dilated(p, w_f, (1, 1), "VALID",
                                 dimension_numbers=dn,
                                 precision=lax.Precision.HIGHEST)
    p = p + b_f.reshape(1, 1, 1, 1)
    return jax.nn.sigmoid(p)


if __name__ == "__main__":
    key = jax.random.PRNGKey(0)
    B, C, H, W = 2, 4, 16, 16
    k = jax.random.split(key, 7)
    x = jax.random.normal(k[0], (B, C, H, W), dtype=jnp.float32)

    # Parameter init mimicking PyTorch Conv2d defaults: U(-1/sqrt(fan_in), +1/sqrt(fan_in)).
    def u(kk, shape, fan_in):
        bound = 1.0 / (fan_in ** 0.5)
        return jax.random.uniform(kk, shape, jnp.float32, -bound, bound)

    w_w = u(k[1], (2, 2, 1, W), 2 * W)   # convW weight  [out=2, in=2, 1, W]
    b_w = u(k[2], (2,), 2 * W)           # convW bias
    w_h = u(k[3], (2, 2, H, 1), 2 * H)   # convH weight  [out=2, in=2, H, 1]
    b_h = u(k[4], (2,), 2 * H)           # convH bias
    w_f = u(k[5], (1, 2, 1, 1), 2)       # final 1x1 conv weight
    b_f = u(k[6], (1,), 2)               # final 1x1 conv bias

    out = twod_conv_sum(x, w_w, b_w, w_h, b_h, w_f, b_f)
    out = jax.block_until_ready(out)

    ref = _reference_forward(x, w_w, b_w, w_h, b_h, w_f, b_f)
    assert out.shape == (B, 1, H, W)
    # Tolerance deliberately 2e-3: MXU default-precision f32 matmuls + the
    # approximate EUP reciprocal in the fused sigmoid (per perf review).
    max_err = float(jnp.max(jnp.abs(out - ref)))
    assert jnp.allclose(out, ref, atol=2e-3, rtol=2e-3), max_err

    print("KERNEL_OK")
</pallas_src>

<mosaic_0001>
module attributes {stable_mosaic.version = 11 : i64} {
  func.func @_twod_conv_sum_kernel(%arg0: i32, %arg1: memref<1xf32, #tpu.memory_space<smem>>, %arg2: memref<1x4x16x16xf32, #tpu.memory_space<vmem>>, %arg3: memref<32x32xf32, #tpu.memory_space<vmem>>, %arg4: memref<32x32xf32, #tpu.memory_space<vmem>>, %arg5: memref<32x16xf32, #tpu.memory_space<vmem>>, %arg6: memref<1x32xf32, #tpu.memory_space<vmem>>, %arg7: memref<1x32xf32, #tpu.memory_space<vmem>>, %arg8: memref<1x16x16xf32, #tpu.memory_space<vmem>>) attributes {dimension_semantics = [#tpu.dimension_semantics<parallel>], iteration_bounds = array<i64: 2>, scalar_prefetch = 0 : i64, scratch_operands = 0 : i64, tpu.core_type = #tpu.core_type<tc>, window_params = [{transform_indices = @transform_0, window_bounds = array<i64: 1>}, {transform_indices = @transform_1, window_bounds = array<i64: 1, 4, 16, 16>}, {pipeline_mode = #tpu.pipeline_mode<synchronous>, transform_indices = @transform_2, window_bounds = array<i64: 32, 32>}, {pipeline_mode = #tpu.pipeline_mode<synchronous>, transform_indices = @transform_3, window_bounds = array<i64: 32, 32>}, {pipeline_mode = #tpu.pipeline_mode<synchronous>, transform_indices = @transform_4, window_bounds = array<i64: 32, 16>}, {pipeline_mode = #tpu.pipeline_mode<synchronous>, transform_indices = @transform_5, window_bounds = array<i64: 1, 32>}, {pipeline_mode = #tpu.pipeline_mode<synchronous>, transform_indices = @transform_6, window_bounds = array<i64: 1, 32>}, {transform_indices = @transform_7, window_bounds = array<i64: 1, 16, 16>}]} {
    %c0 = arith.constant 0 : index
    %c0_0 = arith.constant 0 : index
    %c0_1 = arith.constant 0 : index
    %c0_2 = arith.constant 0 : index
    %0 = vector.load %arg2[%c0, %c0_0, %c0_1, %c0_2] : memref<1x4x16x16xf32, #tpu.memory_space<vmem>>, vector<1x1x16x16xf32>
    %1 = vector.shape_cast %0 : vector<1x1x16x16xf32> to vector<1x16x16xf32>
    %c0_3 = arith.constant 0 : index
    %c1 = arith.constant 1 : index
    %c0_4 = arith.constant 0 : index
    %c0_5 = arith.constant 0 : index
    %2 = vector.load %arg2[%c0_3, %c1, %c0_4, %c0_5] : memref<1x4x16x16xf32, #tpu.memory_space<vmem>>, vector<1x1x16x16xf32>
    %3 = vector.shape_cast %2 : vector<1x1x16x16xf32> to vector<1x16x16xf32>
    %4 = arith.maximumf %1, %3 : vector<1x16x16xf32>
    %5 = arith.addf %1, %3 : vector<1x16x16xf32>
    %c0_6 = arith.constant 0 : index
    %c2 = arith.constant 2 : index
    %c0_7 = arith.constant 0 : index
    %c0_8 = arith.constant 0 : index
    %6 = vector.load %arg2[%c0_6, %c2, %c0_7, %c0_8] : memref<1x4x16x16xf32, #tpu.memory_space<vmem>>, vector<1x1x16x16xf32>
    %7 = vector.shape_cast %6 : vector<1x1x16x16xf32> to vector<1x16x16xf32>
    %8 = arith.maximumf %4, %7 : vector<1x16x16xf32>
    %9 = arith.addf %5, %7 : vector<1x16x16xf32>
    %c0_9 = arith.constant 0 : index
    %c3 = arith.constant 3 : index
    %c0_10 = arith.constant 0 : index
    %c0_11 = arith.constant 0 : index
    %10 = vector.load %arg2[%c0_9, %c3, %c0_10, %c0_11] : memref<1x4x16x16xf32, #tpu.memory_space<vmem>>, vector<1x1x16x16xf32>
    %11 = vector.shape_cast %10 : vector<1x1x16x16xf32> to vector<1x16x16xf32>
    %12 = arith.maximumf %8, %11 : vector<1x16x16xf32>
    %13 = arith.addf %9, %11 : vector<1x16x16xf32>
    %cst = arith.constant 2.500000e-01 : f32
    %14 = vector.broadcast %cst : f32 to vector<1x16x16xf32>
    %15 = arith.mulf %13, %14 : vector<1x16x16xf32>
    %c0_12 = arith.constant 0 : index
    %c0_13 = arith.constant 0 : index
    %16 = vector.load %arg3[%c0_12, %c0_13] : memref<32x32xf32, #tpu.memory_space<vmem>>, vector<32x32xf32>
    %c0_14 = arith.constant 0 : index
    %c0_15 = arith.constant 0 : index
    %17 = vector.load %arg4[%c0_14, %c0_15] : memref<32x32xf32, #tpu.memory_space<vmem>>, vector<32x32xf32>
    %c0_16 = arith.constant 0 : index
    %c0_17 = arith.constant 0 : index
    %18 = vector.load %arg5[%c0_16, %c0_17] : memref<32x16xf32, #tpu.memory_space<vmem>>, vector<32x16xf32>
    %c0_18 = arith.constant 0 : index
    %c0_19 = arith.constant 0 : index
    %19 = vector.load %arg6[%c0_18, %c0_19] : memref<1x32xf32, #tpu.memory_space<vmem>>, vector<1x32xf32>
    %c0_20 = arith.constant 0 : index
    %c0_21 = arith.constant 0 : index
    %20 = vector.load %arg7[%c0_20, %c0_21] : memref<1x32xf32, #tpu.memory_space<vmem>>, vector<1x32xf32>
    %21 = tpu.concatenate %12, %15 in 2 : vector<1x16x16xf32>, vector<1x16x16xf32> -> vector<1x16x32xf32>
    %22 = vector.shape_cast %21 : vector<1x16x32xf32> to vector<16x32xf32>
    %cst_22 = arith.constant dense<0.000000e+00> : vector<16x32xf32>
    %23 = tpu.matmul %22, %16, %cst_22 {dimension_numbers = #tpu.dot_dimension_numbers<[1], [0], [0], [1], [0, 0, 1, 1], [], []>} : vector<16x32xf32>, vector<32x32xf32>, vector<16x32xf32> -> vector<16x32xf32>
    %24 = vector.broadcast %19 : vector<1x32xf32> to vector<16x32xf32>
    %25 = arith.addf %23, %24 : vector<16x32xf32>
    %26 = vector.shape_cast %25 : vector<16x32xf32> to vector<1x16x32xf32>
    %27 = vector.extract_strided_slice %26 {offsets = [0, 0, 0], sizes = [1, 16, 16], strides = [1, 1, 1]} : vector<1x16x32xf32> to vector<1x16x16xf32>
    %28 = tpu.transpose %27, [0, 2, 1] : vector<1x16x16xf32> -> vector<1x16x16xf32>
    %29 = vector.extract_strided_slice %26 {offsets = [0, 0, 16], sizes = [1, 16, 16], strides = [1, 1, 1]} : vector<1x16x32xf32> to vector<1x16x16xf32>
    %30 = tpu.transpose %29, [0, 2, 1] : vector<1x16x16xf32> -> vector<1x16x16xf32>
    %31 = tpu.concatenate %28, %30 in 2 : vector<1x16x16xf32>, vector<1x16x16xf32> -> vector<1x16x32xf32>
    %32 = vector.shape_cast %31 : vector<1x16x32xf32> to vector<16x32xf32>
    %cst_23 = arith.constant dense<0.000000e+00> : vector<16x32xf32>
    %33 = tpu.matmul %32, %17, %cst_23 {dimension_numbers = #tpu.dot_dimension_numbers<[1], [0], [0], [1], [0, 0, 1, 1], [], []>} : vector<16x32xf32>, vector<32x32xf32>, vector<16x32xf32> -> vector<16x32xf32>
    %34 = vector.broadcast %20 : vector<1x32xf32> to vector<16x32xf32>
    %35 = arith.addf %33, %34 : vector<16x32xf32>
    %36 = vector.shape_cast %35 : vector<16x32xf32> to vector<1x16x32xf32>
    %37 = vector.extract_strided_slice %36 {offsets = [0, 0, 0], sizes = [1, 16, 16], strides = [1, 1, 1]} : vector<1x16x32xf32> to vector<1x16x16xf32>
    %38 = tpu.transpose %37, [0, 2, 1] : vector<1x16x16xf32> -> vector<1x16x16xf32>
    %39 = vector.extract_strided_slice %36 {offsets = [0, 0, 16], sizes = [1, 16, 16], strides = [1, 1, 1]} : vector<1x16x32xf32> to vector<1x16x16xf32>
    %40 = tpu.transpose %39, [0, 2, 1] : vector<1x16x16xf32> -> vector<1x16x16xf32>
    %41 = tpu.concatenate %38, %40 in 2 : vector<1x16x16xf32>, vector<1x16x16xf32> -> vector<1x16x32xf32>
    %42 = vector.shape_cast %41 : vector<1x16x32xf32> to vector<16x32xf32>
    %cst_24 = arith.constant dense<0.000000e+00> : vector<16x32xf32>
    %43 = tpu.matmul %42, %16, %cst_24 {dimension_numbers = #tpu.dot_dimension_numbers<[1], [0], [0], [1], [0, 0, 1, 1], [], []>} : vector<16x32xf32>, vector<32x32xf32>, vector<16x32xf32> -> vector<16x32xf32>
    %44 = vector.broadcast %19 : vector<1x32xf32> to vector<16x32xf32>
    %45 = arith.addf %43, %44 : vector<16x32xf32>
    %46 = vector.shape_cast %45 : vector<16x32xf32> to vector<1x16x32xf32>
    %47 = vector.extract_strided_slice %46 {offsets = [0, 0, 0], sizes = [1, 16, 16], strides = [1, 1, 1]} : vector<1x16x32xf32> to vector<1x16x16xf32>
    %48 = tpu.transpose %47, [0, 2, 1] : vector<1x16x16xf32> -> vector<1x16x16xf32>
    %49 = vector.extract_strided_slice %46 {offsets = [0, 0, 16], sizes = [1, 16, 16], strides = [1, 1, 1]} : vector<1x16x32xf32> to vector<1x16x16xf32>
    %50 = tpu.transpose %49, [0, 2, 1] : vector<1x16x16xf32> -> vector<1x16x16xf32>
    %51 = tpu.concatenate %48, %50 in 2 : vector<1x16x16xf32>, vector<1x16x16xf32> -> vector<1x16x32xf32>
    %52 = vector.shape_cast %51 : vector<1x16x32xf32> to vector<16x32xf32>
    %cst_25 = arith.constant dense<0.000000e+00> : vector<16x16xf32>
    %53 = tpu.matmul %52, %18, %cst_25 {dimension_numbers = #tpu.dot_dimension_numbers<[1], [0], [0], [1], [0, 0, 1, 1], [], []>} : vector<16x32xf32>, vector<32x16xf32>, vector<16x16xf32> -> vector<16x16xf32>
    %c0_26 = arith.constant 0 : index
    %54 = memref.load %arg1[%c0_26] : memref<1xf32, #tpu.memory_space<smem>>
    %55 = vector.broadcast %54 : f32 to vector<16x16xf32>
    %56 = arith.addf %53, %55 : vector<16x16xf32>
    %cst_27 = arith.constant 0.000000e+00 : f32
    %57 = vector.broadcast %cst_27 : f32 to vector<16x16xf32>
    %58 = arith.subf %57, %56 : vector<16x16xf32>
    %59 = math.exp %58 : vector<16x16xf32>
    %cst_28 = arith.constant 1.000000e+00 : f32
    %60 = vector.broadcast %cst_28 : f32 to vector<16x16xf32>
    %61 = arith.addf %60, %59 : vector<16x16xf32>
    %62 = tpu.reciprocal %61 {approx = true} : vector<16x16xf32> -> vector<16x16xf32>
    %63 = vector.shape_cast %62 : vector<16x16xf32> to vector<1x16x16xf32>
    %64 = tpu.transpose %63, [0, 2, 1] : vector<1x16x16xf32> -> vector<1x16x16xf32>
    %c0_29 = arith.constant 0 : index
    %c0_30 = arith.constant 0 : index
    %c0_31 = arith.constant 0 : index
    %65 = vector.load %arg8[%c0_29, %c0_30, %c0_31] : memref<1x16x16xf32, #tpu.memory_space<vmem>>, vector<1x16x16xf32>
    tpu.vector_store %arg8[%c0_29, %c0_30, %c0_31], %64 {strides = array<i32>} : memref<1x16x16xf32, #tpu.memory_space<vmem>>, vector<1x16x16xf32>,
    return
  }
  func.func @transform_0(%arg0: i32) -> i32 {
    %c0_i32 = arith.constant 0 : i32
    %c0_i32_0 = arith.constant 0 : i32
    return %c0_i32 : i32
  }
  func.func @transform_1(%arg0: i32) -> (i32, i32, i32, i32) {
    %c0_i32 = arith.constant 0 : i32
    %c0_i32_0 = arith.constant 0 : i32
    %c0_i32_1 = arith.constant 0 : i32
    %c0_i32_2 = arith.constant 0 : i32
    return %arg0, %c0_i32, %c0_i32_0, %c0_i32_1 : i32, i32, i32, i32
  }
  func.func @transform_2(%arg0: i32) -> (i32, i32) {
    %c0_i32 = arith.constant 0 : i32
    %c0_i32_0 = arith.constant 0 : i32
    %c0_i32_1 = arith.constant 0 : i32
    return %c0_i32, %c0_i32_0 : i32, i32
  }
  func.func @transform_3(%arg0: i32) -> (i32, i32) {
    %c0_i32 = arith.constant 0 : i32
    %c0_i32_0 = arith.constant 0 : i32
    %c0_i32_1 = arith.constant 0 : i32
    return %c0_i32, %c0_i32_0 : i32, i32
  }
  func.func @transform_4(%arg0: i32) -> (i32, i32) {
    %c0_i32 = arith.constant 0 : i32
    %c0_i32_0 = arith.constant 0 : i32
    %c0_i32_1 = arith.constant 0 : i32
    return %c0_i32, %c0_i32_0 : i32, i32
  }
  func.func @transform_5(%arg0: i32) -> (i32, i32) {
    %c0_i32 = arith.constant 0 : i32
    %c0_i32_0 = arith.constant 0 : i32
    %c0_i32_1 = arith.constant 0 : i32
    return %c0_i32, %c0_i32_0 : i32, i32
  }
  func.func @transform_6(%arg0: i32) -> (i32, i32) {
    %c0_i32 = arith.constant 0 : i32
    %c0_i32_0 = arith.constant 0 : i32
    %c0_i32_1 = arith.constant 0 : i32
    return %c0_i32, %c0_i32_0 : i32, i32
  }
  func.func @transform_7(%arg0: i32) -> (i32, i32, i32) {
    %c0_i32 = arith.constant 0 : i32
    %c0_i32_0 = arith.constant 0 : i32
    %c0_i32_1 = arith.constant 0 : i32
    return %arg0, %c0_i32, %c0_i32_0 : i32, i32, i32
  }
}

</mosaic_0001>

<llo_original>
// kernel: tpu_custom_call.1
$region0: #{tpu_custom_call.1}
  #allocation0 [shape = 'u32[]', space=smem, size = 0x4, offset = 0x4, fixed_abs, tag = 'smem constant byte address 0x4 - core index']
  #allocation1 [shape = 'u32[72,128]{1,0:T(1,128)}', space=vmem, size = 0x9000, scoped, tag = 'internal scratch']
  #allocation2 [shape = 'f32[1]{0:T(128)S(6)}', space=smem, size = 0x200, scoped, tag = 'scoped memory for tpu_custom_call.1']
  %s0 = inlined_call_operand.<no memory space> [shape: f32[1], index: 0, kind: input, shape index: {}]
  %s1 = inlined_call_operand.hbm [shape: f32[2,4,16,16], index: 1, kind: input, shape index: {}]
  %s2 = inlined_call_operand.vmem [shape: f32[32,32], index: 2, kind: input, shape index: {}]
  %s3 = inlined_call_operand.hbm [shape: f32[32,32], index: 3, kind: input, shape index: {}]
  %s4 = inlined_call_operand.vmem [shape: f32[32,16], index: 4, kind: input, shape index: {}]
  %s5 = inlined_call_operand.vmem [shape: f32[1,32], index: 5, kind: input, shape index: {}]
  %s6 = inlined_call_operand.vmem [shape: f32[1,32], index: 6, kind: input, shape index: {}]
  %s7 = inlined_call_operand.hbm [shape: f32[2,16,16], index: 7, kind: output, shape index: {}]
  %s8 = sld [smem:[#allocation0]]
  $region69: #{tpu_custom_call.1} parent=0
    _
  %s10 = ssub.s32 1, %s8
  %s11 = scalar_select 0, %s10, %s8
  %12 = sst [smem:[#allocation2]] %s0
  $region1: #{tpu_custom_call.1} parent=0
    #allocation3 [shape = 'u8[65536]{0}', space=vmem, size = 0x10000, scoped, tag = 'input window, operand 1']
    #allocation4 [shape = 's32[2]{0}', space=sflag, size = 0x8, scoped, tag = 'scoped memory for tpu_custom_call.1']
    #allocation5 [shape = 's32[2]{0}', space=sflag, size = 0x8, scoped, tag = 'scoped memory for tpu_custom_call.1']
    #allocation6 [shape = 'u8[16384]{0}', space=vmem, size = 0x4000, scoped, tag = 'input window, operand 3, single buffered']
    #allocation7 [shape = 's32[1]{0}', space=sflag, size = 0x4, scoped, tag = 'scoped memory for tpu_custom_call.1']
    #allocation8 [shape = 'u8[16384]{0}', space=vmem, size = 0x4000, scoped, tag = 'output window, operand 0']
    %13 = vsyncpa [#allocation4], 0
    %s14 = scalar_lea.sflag [#allocation4], 1
    %15 = vsyncpa %s14, 0
    %16 = vsyncpa [#allocation7], 0
    %17 = vsyncpa [#allocation5], 0
    %s18 = scalar_lea.sflag [#allocation5], 1
    %19 = vsyncpa %s18, 0
    loop: start=0, step=1, limit=4
    $region2: #{tpu_custom_call.1} parent=1 // loop_pre_header
      _
    $region3: #{tpu_custom_call.1} parent=1 // loop_header
      %s21 = sphi 0, %s25
      %p22 = scmp.ge.s32.totalorder %s21, 4
      %s29 = sphi 0, %s29
      %s31 = sphi 0, %s29
      %s32 = sphi 0, %s31
      %s46 = sphi 0, %s32
      %s52 = sphi 0, %s54
      %s55 = sphi 0, %s52
      %s56 = sphi 0, %s55
      %s72 = sphi 0, %s56
      %s76 = sphi 0, %s76
      %s78 = sphi 0, %s76
      %s79 = sphi 0, %s78
      %s93 = sphi 0, %s79
      %s97 = sphi 0, %s97
      %s99 = sphi 0, %s97
      %s100 = sphi 0, %s99
      %s114 = sphi 0, %s100
      %s118 = sphi 0, %s118
      %s120 = sphi 0, %s118
      %s121 = sphi 0, %s120
      %s135 = sphi 0, %s121
      %s139 = sphi 0, %s139
      %s141 = sphi 0, %s139
      %s142 = sphi 0, %s141
      %s156 = sphi 0, %s142
      %s160 = sphi 0, %s160
      %s162 = sphi 0, %s160
      %s163 = sphi 0, %s162
      %s177 = sphi 0, %s163
      %s183 = sphi 0, %s185
      %s186 = sphi 0, %s183
      %s187 = sphi 0, %s186
      %s203 = sphi 0, %s187
    $region4: #{tpu_custom_call.1} parent=1 // loop_header_branch
      %24 = sbr.rel (%p22) target = $region8
    $region5: #{tpu_custom_call.1} parent=1 // loop_body
      %s26 = ssub.s32 %s21, 1
      %s27 = ssub.s32 %s21, 2
      %s28 = sadd.s32 %s21, 1
      %s30 = sadd.s32 %s29, 1
      %p33 = scmp.eq.s32.totalorder %s21, 1
      %p34 = scmp.ne.s32.totalorder %s29, %s31
      %p35 = scmp.eq.s32.totalorder %s21, 0
      %p36 = por %p34, %p35
      %p37 = scmp.ne.s32.totalorder %s29, %s31
      %p38 = scmp.eq.s32.totalorder %s26, 1
      %p39 = por %p37, %p38
      %p40 = scmp.ne.s32.totalorder %s31, %s32
      %p41 = scmp.eq.s32.totalorder %s26, 0
      %p42 = por %p40, %p41
      %p43 = scmp.ne.s32.totalorder %s31, %s32
      %p44 = scmp.eq.s32.totalorder %s27, 1
      %p45 = por %p43, %p44
      %p47 = scmp.ne.s32.totalorder %s32, %s46
      %p48 = scmp.eq.s32.totalorder %s27, 0
      %p49 = por %p47, %p48
      %s50 = ssub.s32 %s21, %s28
      %p51 = scmp.eq.s32.totalorder %s50, 0
      %s53 = sadd.s32 %s52, 1
      %s54 = scalar_select %p51, %s52, %s53
      %p57 = pneg %p51
      %p58 = scmp.eq.s32.totalorder %s21, 1
      %p59 = por %p57, %p58
      %p60 = scmp.ne.s32.totalorder %s52, %s55
      %p61 = scmp.eq.s32.totalorder %s21, 0
      %p62 = por %p60, %p61
      %p63 = scmp.ne.s32.totalorder %s52, %s55
      %p64 = scmp.eq.s32.totalorder %s26, 1
      %p65 = por %p63, %p64
      %p66 = scmp.ne.s32.totalorder %s55, %s56
      %p67 = scmp.eq.s32.totalorder %s26, 0
      %p68 = por %p66, %p67
      %p69 = scmp.ne.s32.totalorder %s55, %s56
      %p70 = scmp.eq.s32.totalorder %s27, 1
      %p71 = por %p69, %p70
      %p73 = scmp.ne.s32.totalorder %s56, %s72
      %p74 = scmp.eq.s32.totalorder %s27, 0
      %p75 = por %p73, %p74
      %s77 = sadd.s32 %s76, 1
      %p80 = scmp.eq.s32.totalorder %s21, 1
      %p81 = scmp.ne.s32.totalorder %s76, %s78
      %p82 = scmp.eq.s32.totalorder %s21, 0
      %p83 = por %p81, %p82
      %p84 = scmp.ne.s32.totalorder %s76, %s78
      %p85 = scmp.eq.s32.totalorder %s26, 1
      %p86 = por %p84, %p85
      %p87 = scmp.ne.s32.totalorder %s78, %s79
      %p88 = scmp.eq.s32.totalorder %s26, 0
      %p89 = por %p87, %p88
      %p90 = scmp.ne.s32.totalorder %s78, %s79
      %p91 = scmp.eq.s32.totalorder %s27, 1
      %p92 = por %p90, %p91
      %p94 = scmp.ne.s32.totalorder %s79, %s93
      %p95 = scmp.eq.s32.totalorder %s27, 0
      %p96 = por %p94, %p95
      %s98 = sadd.s32 %s97, 1
      %p101 = scmp.eq.s32.totalorder %s21, 1
      %p102 = scmp.ne.s32.totalorder %s97, %s99
      %p103 = scmp.eq.s32.totalorder %s21, 0
      %p104 = por %p102, %p103
      %p105 = scmp.ne.s32.totalorder %s97, %s99
      %p106 = scmp.eq.s32.totalorder %s26, 1
      %p107 = por %p105, %p106
      %p108 = scmp.ne.s32.totalorder %s99, %s100
      %p109 = scmp.eq.s32.totalorder %s26, 0
      %p110 = por %p108, %p109
      %p111 = scmp.ne.s32.totalorder %s99, %s100
      %p112 = scmp.eq.s32.totalorder %s27, 1
      %p113 = por %p111, %p112
      %p115 = scmp.ne.s32.totalorder %s100, %s114
      %p116 = scmp.eq.s32.totalorder %s27, 0
      %p117 = por %p115, %p116
      %s119 = sadd.s32 %s118, 1
      %p122 = scmp.eq.s32.totalorder %s21, 1
      %p123 = scmp.ne.s32.totalorder %s118, %s120
      %p124 = scmp.eq.s32.totalorder %s21, 0
      %p125 = por %p123, %p124
      %p126 = scmp.ne.s32.totalorder %s118, %s120
      %p127 = scmp.eq.s32.totalorder %s26, 1
      %p128 = por %p126, %p127
      %p129 = scmp.ne.s32.totalorder %s120, %s121
      %p130 = scmp.eq.s32.totalorder %s26, 0
      %p131 = por %p129, %p130
      %p132 = scmp.ne.s32.totalorder %s120, %s121
      %p133 = scmp.eq.s32.totalorder %s27, 1
      %p134 = por %p132, %p133
      %p136 = scmp.ne.s32.totalorder %s121, %s135
      %p137 = scmp.eq.s32.totalorder %s27, 0
      %p138 = por %p136, %p137
      %s140 = sadd.s32 %s139, 1
      %p143 = scmp.eq.s32.totalorder %s21, 1
      %p144 = scmp.ne.s32.totalorder %s139, %s141
      %p145 = scmp.eq.s32.totalorder %s21, 0
      %p146 = por %p144, %p145
      %p147 = scmp.ne.s32.totalorder %s139, %s141
      %p148 = scmp.eq.s32.totalorder %s26, 1
      %p149 = por %p147, %p148
      %p150 = scmp.ne.s32.totalorder %s141, %s142
      %p151 = scmp.eq.s32.totalorder %s26, 0
      %p152 = por %p150, %p151
      %p153 = scmp.ne.s32.totalorder %s141, %s142
      %p154 = scmp.eq.s32.totalorder %s27, 1
      %p155 = por %p153, %p154
      %p157 = scmp.ne.s32.totalorder %s142, %s156
      %p158 = scmp.eq.s32.totalorder %s27, 0
      %p159 = por %p157, %p158
      %s161 = sadd.s32 %s160, 1
      %p164 = scmp.eq.s32.totalorder %s21, 1
      %p165 = scmp.ne.s32.totalorder %s160, %s162
      %p166 = scmp.eq.s32.totalorder %s21, 0
      %p167 = por %p165, %p166
      %p168 = scmp.ne.s32.totalorder %s160, %s162
      %p169 = scmp.eq.s32.totalorder %s26, 1
      %p170 = por %p168, %p169
      %p171 = scmp.ne.s32.totalorder %s162, %s163
      %p172 = scmp.eq.s32.totalorder %s26, 0
      %p173 = por %p171, %p172
      %p174 = scmp.ne.s32.totalorder %s162, %s163
      %p175 = scmp.eq.s32.totalorder %s27, 1
      %p176 = por %p174, %p175
      %p178 = scmp.ne.s32.totalorder %s163, %s177
      %p179 = scmp.eq.s32.totalorder %s27, 0
      %p180 = por %p178, %p179
      %s181 = ssub.s32 %s21, %s28
      %p182 = scmp.eq.s32.totalorder %s181, 0
      %s184 = sadd.s32 %s183, 1
      %s185 = scalar_select %p182, %s183, %s184
      %p188 = pneg %p182
      %p189 = scmp.eq.s32.totalorder %s21, 1
      %p190 = por %p188, %p189
      %p191 = scmp.ne.s32.totalorder %s183, %s186
      %p192 = scmp.eq.s32.totalorder %s21, 0
      %p193 = por %p191, %p192
      %p194 = scmp.ne.s32.totalorder %s183, %s186
      %p195 = scmp.eq.s32.totalorder %s26, 1
      %p196 = por %p194, %p195
      %p197 = scmp.ne.s32.totalorder %s186, %s187
      %p198 = scmp.eq.s32.totalorder %s26, 0
      %p199 = por %p197, %p198
      %p200 = scmp.ne.s32.totalorder %s186, %s187
      %p201 = scmp.eq.s32.totalorder %s27, 1
      %p202 = por %p200, %p201
      %p204 = scmp.ne.s32.totalorder %s187, %s203
      %p205 = scmp.eq.s32.totalorder %s27, 0
      %p206 = por %p204, %p205
      %p207 = scmp.le.s32.totalorder 1, %s21
      %p208 = scmp.lt.s32.totalorder %s21, 3
      %p209 = pnand %p207, %p208
      %p210 = pneg %p209
      // Predicated region
      $region9: #{tpu_custom_call.1} parent=5 // pred_check
        _
      $region10: #{tpu_custom_call.1} parent=5 // pred_check_branch
        %212 = sbr.rel (%p209) target = $region12
      $region11: #{tpu_custom_call.1} parent=5 // pred_region
        %s213 = ssub.s32 %s21, 1
        // Predicated region
        $region13: #{tpu_custom_call.1} parent=11 // pred_check
          %p214 = pneg %p42
        $region14: #{tpu_custom_call.1} parent=11 // pred_check_branch
          %216 = sbr.rel (%p214) target = $region16
        $region15: #{tpu_custom_call.1} parent=11 // pred_region
          _
        $region16: #{tpu_custom_call.1} parent=11 // pred_fallthru
          _
        // Predicated region
        $region17: #{tpu_custom_call.1} parent=11 // pred_check
          %p217 = pneg %p89
        $region18: #{tpu_custom_call.1} parent=11 // pred_check_branch
          %219 = sbr.rel (%p217) target = $region20
        $region19: #{tpu_custom_call.1} parent=11 // pred_region
          _
        $region20: #{tpu_custom_call.1} parent=11 // pred_fallthru
          _
        // Predicated region
        $region21: #{tpu_custom_call.1} parent=11 // pred_check
          %p220 = pneg %p110
        $region22: #{tpu_custom_call.1} parent=11 // pred_check_branch
          %222 = sbr.rel (%p220) target = $region24
        $region23: #{tpu_custom_call.1} parent=11 // pred_region
          %224 = vsyncadd [#allocation7], 0
          %s225 = sshll.u32 %s3, 4
          %s226 = int_to_ptr.hbm [resolvable:$true] %s225
          %s227 = sshll.u32 [#allocation6], 4
          %s228 = int_to_ptr.vmem [resolvable:$true] %s227
          %233 = dma.hbm_to_vmem [thread:$0]  %s226, 512, %s228, [#allocation7], 128, 128, 8
        $region24: #{tpu_custom_call.1} parent=11 // pred_fallthru
          _
        // Predicated region
        $region25: #{tpu_custom_call.1} parent=11 // pred_check
          %p234 = pneg %p131
        $region26: #{tpu_custom_call.1} parent=11 // pred_check_branch
          %236 = sbr.rel (%p234) target = $region28
        $region27: #{tpu_custom_call.1} parent=11 // pred_region
          _
        $region28: #{tpu_custom_call.1} parent=11 // pred_fallthru
          _
        // Predicated region
        $region29: #{tpu_custom_call.1} parent=11 // pred_check
          %p237 = pneg %p152
        $region30: #{tpu_custom_call.1} parent=11 // pred_check_branch
          %239 = sbr.rel (%p237) target = $region32
        $region31: #{tpu_custom_call.1} parent=11 // pred_region
          _
        $region32: #{tpu_custom_call.1} parent=11 // pred_fallthru
          _
        // Predicated region
        $region33: #{tpu_custom_call.1} parent=11 // pred_check
          %p240 = pneg %p173
        $region34: #{tpu_custom_call.1} parent=11 // pred_check_branch
          %242 = sbr.rel (%p240) target = $region36
        $region35: #{tpu_custom_call.1} parent=11 // pred_region
          _
        $region36: #{tpu_custom_call.1} parent=11 // pred_fallthru
          _
      $region12: #{tpu_custom_call.1} parent=5 // pred_fallthru
        _
      %p243 = scmp.lt.s32.totalorder %s21, 2
      // Predicated region
      $region37: #{tpu_custom_call.1} parent=5 // pred_check
        %p244 = pneg %p243
      $region38: #{tpu_custom_call.1} parent=5 // pred_check_branch
        %246 = sbr.rel (%p244) target = $region40
      $region39: #{tpu_custom_call.1} parent=5 // pred_region
        // Predicated region
        $region41: #{tpu_custom_call.1} parent=39 // pred_check
          %p247 = pneg %p62
        $region42: #{tpu_custom_call.1} parent=39 // pred_check_branch
          %249 = sbr.rel (%p247) target = $region44
        $region43: #{tpu_custom_call.1} parent=39 // pred_region
          %s250 = sand.u32 %s52, 1
          %s251 = scalar_lea.sflag [#allocation4], %s250
          %s252 = sand.u32 %s52, 1
          %s253 = smul.addr %s252, 64
          %s254 = scalar_lea.vmem [#allocation3], %s253
          %256 = vsyncadd %s251, 0
          %s257 = smul.addr %s21, 8
          %s258 = smul.addr %s257, 8
          %s259 = scalar_lea.hbm %s1, %s258
          %s260 = sshll.u32 %s259, 4
          %s261 = int_to_ptr.hbm [resolvable:$true] %s260
          %s262 = sshll.u32 %s254, 4
          %s263 = int_to_ptr.vmem [resolvable:$true] %s262
          %268 = dma.hbm_to_vmem [thread:$0]  %s261, 1024, %s263, %s251, 128, 128, 8
        $region44: #{tpu_custom_call.1} parent=39 // pred_fallthru
          _
      $region40: #{tpu_custom_call.1} parent=5 // pred_fallthru
        _
      %p269 = scmp.le.s32.totalorder 1, %s21
      %p270 = scmp.lt.s32.totalorder %s21, 3
      %p271 = pnand %p269, %p270
      %p272 = pneg %p271
      // Predicated region
      $region45: #{tpu_custom_call.1} parent=5 // pred_check
        _
      $region46: #{tpu_custom_call.1} parent=5 // pred_check_branch
        %274 = sbr.rel (%p271) target = $region48
      $region47: #{tpu_custom_call.1} parent=5 // pred_region
        %s275 = ssub.s32 %s21, 1
        %s276 = sand.u32 %s55, 1
        %s277 = scalar_lea.sflag [#allocation4], %s276
        %s278 = sand.u32 %s55, 1
        %s279 = smul.addr %s278, 64
        %s280 = scalar_lea.vmem [#allocation3], %s279
        // Predicated region
        $region49: #{tpu_custom_call.1} parent=47 // pred_check
          %p281 = pneg %p68
        $region50: #{tpu_custom_call.1} parent=47 // pred_check_branch
          %283 = sbr.rel (%p281) target = $region52
        $region51: #{tpu_custom_call.1} parent=47 // pred_region
          %285 = dma.done %s277, 1024
        $region52: #{tpu_custom_call.1} parent=47 // pred_fallthru
          _
        // Predicated region
        $region53: #{tpu_custom_call.1} parent=47 // pred_check
          %p286 = pneg %p110
        $region54: #{tpu_custom_call.1} parent=47 // pred_check_branch
          %288 = sbr.rel (%p286) target = $region56
        $region55: #{tpu_custom_call.1} parent=47 // pred_region
          %290 = dma.done [#allocation7], 512
        $region56: #{tpu_custom_call.1} parent=47 // pred_fallthru
          _
        %p291 = pneg %p42
        %p292 = pneg %p39
        %s293 = sand.u32 %s55, 1
        %s294 = scalar_lea.sflag [#allocation4], %s293
        %s295 = sand.u32 %s55, 1
        %s296 = smul.addr %s295, 64
        %s297 = scalar_lea.vmem [#allocation3], %s296
        %p298 = pneg %p68
        %p299 = pneg %p65
        %p300 = pneg %p89
        %p301 = pneg %p86
        %p302 = pneg %p110
        %p303 = pneg %p107
        %p304 = pneg %p131
        %p305 = pneg %p128
        %p306 = pneg %p152
        %p307 = pneg %p149
        %p308 = pneg %p173
        %p309 = pneg %p170
        %p310 = pneg %p199
        %p311 = pneg %p196
        %s312 = sand.u32 %s186, 1
        %s313 = scalar_lea.sflag [#allocation5], %s312
        %s314 = sand.u32 %s186, 1
        %s315 = smul.addr %s314, 16
        %s316 = scalar_lea.vmem [#allocation8], %s315
        %v317 = vld [vmem:[%s280] sm:$0xff]
        %v318 = vld [vmem:[%s280 + $0x8] sm:$0xff]
        %s319 = scalar_lea.vmem %s280, 16 [#allocation3]
        %v320 = vld [vmem:[%s319] sm:$0xff]
        %v321 = vld [vmem:[%s319 + $0x8] sm:$0xff]
        %v322 = vmax.f32 %v317, %v320
        %v323 = vmax.f32 %v318, %v321
        %v324 = vadd.f32 %v317, %v320
        %v325 = vadd.f32 %v318, %v321
        %s326 = scalar_lea.vmem %s280, 32 [#allocation3]
        %v327 = vld [vmem:[%s326] sm:$0xff]
        %v328 = vld [vmem:[%s326 + $0x8] sm:$0xff]
        %v329 = vmax.f32 %v322, %v327
        %v330 = vmax.f32 %v323, %v328
        %v331 = vadd.f32 %v324, %v327
        %v332 = vadd.f32 %v325, %v328
        %s333 = scalar_lea.vmem %s280, 48 [#allocation3]
        %v334 = vld [vmem:[%s333] sm:$0xff]
        %v335 = vld [vmem:[%s333 + $0x8] sm:$0xff]
        %v336 = vmax.f32 %v329, %v334
        %v337 = vmax.f32 %v330, %v335
        %v338 = vadd.f32 %v331, %v334
        %v339 = vadd.f32 %v332, %v335
        %v340 = vmul.f32 %v338, 0.25
        %v341 = vmul.f32 %v339, 0.25
        %v342 = vld [vmem:[%s2] sm:$0xff]
        %v343 = vld [vmem:[%s2 + $0x8] sm:$0xff]
        %v344 = vld [vmem:[%s2 + $0x10] sm:$0xff]
        %v345 = vld [vmem:[%s2 + $0x18] sm:$0xff]
        %v346 = vld [vmem:[#allocation6] sm:$0xff]
        %v347 = vld [vmem:[#allocation6 + $0x8] sm:$0xff]
        %v348 = vld [vmem:[#allocation6 + $0x10] sm:$0xff]
        %v349 = vld [vmem:[#allocation6 + $0x18] sm:$0xff]
        %v350 = vld [vmem:[%s4] sm:$0xff]
        %v351 = vld [vmem:[%s4 + $0x8] sm:$0xff]
        %v352 = vld [vmem:[%s4 + $0x10] sm:$0xff]
        %v353 = vld [vmem:[%s4 + $0x18] sm:$0xff]
        %v354 = vld [vmem:[%s5] sm:$0x1]
        %v355 = vld [vmem:[%s6] sm:$0x1]
        %358 = vrot.lane.b32.xlu0 %v340, 16
        %v359 = vpop.permute.xlu0 %358
        %360 = vrot.lane.b32.xlu0 %v341, 16
        %v361 = vpop.permute.xlu0 %360
        %vm364 = vcmask 130048
        %v365 = vsel %vm364, %v336, %v359
        %v366 = vsel %vm364, %v337, %v361
        %v368 = vperm.slane %v354, 0
        %vm370 = vcmask 261120
        %v372 = vsel %vm370, %v365, 0
        %v375 = vsel %vm370, %v366, 0
        %377 = vmatpush.msra.mxu0 0.0
        %378 = vmatpush.msra.mxu0 0.0
        %379 = vmatpush.msra.mxu0 0.0
        %380 = vmatpush.msra.mxu0 0.0
        %381 = vmatpush.msra.mxu0 0.0
        %382 = vmatpush.msra.mxu0 0.0
        %383 = vmatpush.msra.mxu0 0.0
        %384 = vmatpush.msra.mxu0 0.0
        %385 = vmatpush.msra.mxu0 0.0
        %386 = vmatpush.msra.mxu0 0.0
        %387 = vmatpush.msra.mxu0 0.0
        %388 = vmatpush.msra.mxu0 0.0
        %389 = vmatpush.msra.mxu0 %v345
        %390 = vmatpush.msra.mxu0 %v344
        %391 = vmatpush.msra.mxu0 %v343
        %392 = vmatpush.msra.mxu0 %v342
        %393 = vmatmul.f32.gmra.mxu0 %v372
        %v394 = vpop.f32.mrf.mxu0
        %v395 = vadd.f32 %v368, %v394
        %396 = vmatmul.f32.gmra.mxu0 %v375
        %v397 = vpop.f32.mrf.mxu0
        %v398 = vadd.f32 %v368, %v397
        %399 = vdwg.mxu0
        %400 = vxpose.xlu0.b32.start [1/16] %v395, 128
        %401 = vxpose.xlu0.b32.cont [2/16] %v398, 128
        %402 = vxpose.xlu0.b32.cont [3/16] 0.0, 128
        %403 = vxpose.xlu0.b32.cont [4/16] 0.0, 128
        %404 = vxpose.xlu0.b32.cont [5/16] 0.0, 128
        %405 = vxpose.xlu0.b32.cont [6/16] 0.0, 128
        %406 = vxpose.xlu0.b32.cont [7/16] 0.0, 128
        %407 = vxpose.xlu0.b32.cont [8/16] 0.0, 128
        %408 = vxpose.xlu0.b32.cont [9/16] 0.0, 128
        %409 = vxpose.xlu0.b32.cont [10/16] 0.0, 128
        %410 = vxpose.xlu0.b32.cont [11/16] 0.0, 128
        %411 = vxpose.xlu0.b32.cont [12/16] 0.0, 128
        %412 = vxpose.xlu0.b32.cont [13/16] 0.0, 128
        %413 = vxpose.xlu0.b32.cont [14/16] 0.0, 128
        %414 = vxpose.xlu0.b32.cont [15/16] 0.0, 128
        %415 = vxpose.xlu0.b32.end [16/16] 0.0, 128
        %v416 = vpop.trf.xlu0
        %v417 = vpop.trf.xlu0
        %v418 = vpop.trf.xlu0
        %v419 = vpop.trf.xlu0
        %v420 = vpop.trf.xlu0
        %v421 = vpop.trf.xlu0
        %v422 = vpop.trf.xlu0
        %v423 = vpop.trf.xlu0
        %v424 = vpop.trf.xlu0
        %v425 = vpop.trf.xlu0
        %v426 = vpop.trf.xlu0
        %v427 = vpop.trf.xlu0
        %v428 = vpop.trf.xlu0
        %v429 = vpop.trf.xlu0
        %v430 = vpop.trf.xlu0
        %v431 = vpop.trf.xlu0
        %434 = vrot.lane.b32.xlu0 %v395, 112
        %v435 = vpop.permute.xlu0 %434
        %436 = vrot.lane.b32.xlu0 %v398, 112
        %v437 = vpop.permute.xlu0 %436
        %440 = vxpose.xlu0.b32.start [1/16] %v435, 128
        %441 = vxpose.xlu0.b32.cont [2/16] %v437, 128
        %442 = vxpose.xlu0.b32.cont [3/16] 0.0, 128
        %443 = vxpose.xlu0.b32.cont [4/16] 0.0, 128
        %444 = vxpose.xlu0.b32.cont [5/16] 0.0, 128
        %445 = vxpose.xlu0.b32.cont [6/16] 0.0, 128
        %446 = vxpose.xlu0.b32.cont [7/16] 0.0, 128
        %447 = vxpose.xlu0.b32.cont [8/16] 0.0, 128
        %448 = vxpose.xlu0.b32.cont [9/16] 0.0, 128
        %449 = vxpose.xlu0.b32.cont [10/16] 0.0, 128
        %450 = vxpose.xlu0.b32.cont [11/16] 0.0, 128
        %451 = vxpose.xlu0.b32.cont [12/16] 0.0, 128
        %452 = vxpose.xlu0.b32.cont [13/16] 0.0, 128
        %453 = vxpose.xlu0.b32.cont [14/16] 0.0, 128
        %454 = vxpose.xlu0.b32.cont [15/16] 0.0, 128
        %455 = vxpose.xlu0.b32.end [16/16] 0.0, 128
        %v456 = vpop.trf.xlu0
        %v457 = vpop.trf.xlu0
        %v458 = vpop.trf.xlu0
        %v459 = vpop.trf.xlu0
        %v460 = vpop.trf.xlu0
        %v461 = vpop.trf.xlu0
        %v462 = vpop.trf.xlu0
        %v463 = vpop.trf.xlu0
        %v464 = vpop.trf.xlu0
        %v465 = vpop.trf.xlu0
        %v466 = vpop.trf.xlu0
        %v467 = vpop.trf.xlu0
        %v468 = vpop.trf.xlu0
        %v469 = vpop.trf.xlu0
        %v470 = vpop.trf.xlu0
        %v471 = vpop.trf.xlu0
        %474 = vrot.lane.b32.xlu0 %v456, 16
        %v475 = vpop.permute.xlu0 %474
        %476 = vrot.lane.b32.xlu0 %v457, 16
        %v477 = vpop.permute.xlu0 %476
        %v480 = vsel %vm364, %v416, %v475
        %v481 = vsel %vm364, %v417, %v477
        %v483 = vperm.slane %v355, 0
        %v486 = vsel %vm370, %v480, 0
        %v489 = vsel %vm370, %v481, 0
        %491 = vmatpush.msra.mxu0 0.0
        %492 = vmatpush.msra.mxu0 0.0
        %493 = vmatpush.msra.mxu0 0.0
        %494 = vmatpush.msra.mxu0 0.0
        %495 = vmatpush.msra.mxu0 0.0
        %496 = vmatpush.msra.mxu0 0.0
        %497 = vmatpush.msra.mxu0 0.0
        %498 = vmatpush.msra.mxu0 0.0
        %499 = vmatpush.msra.mxu0 0.0
        %500 = vmatpush.msra.mxu0 0.0
        %501 = vmatpush.msra.mxu0 0.0
        %502 = vmatpush.msra.mxu0 0.0
        %503 = vmatpush.msra.mxu0 %v349
        %504 = vmatpush.msra.mxu0 %v348
        %505 = vmatpush.msra.mxu0 %v347
        %506 = vmatpush.msra.mxu0 %v346
        %507 = vmatmul.f32.gmra.mxu0 %v486
        %v508 = vpop.f32.mrf.mxu0
        %v509 = vadd.f32 %v483, %v508
        %510 = vmatmul.f32.gmra.mxu0 %v489
        %v511 = vpop.f32.mrf.mxu0
        %v512 = vadd.f32 %v483, %v511
        %513 = vdwg.mxu0
        %514 = vxpose.xlu0.b32.start [1/16] %v509, 128
        %515 = vxpose.xlu0.b32.cont [2/16] %v512, 128
        %516 = vxpose.xlu0.b32.cont [3/16] 0.0, 128
        %517 = vxpose.xlu0.b32.cont [4/16] 0.0, 128
        %518 = vxpose.xlu0.b32.cont [5/16] 0.0, 128
        %519 = vxpose.xlu0.b32.cont [6/16] 0.0, 128
        %520 = vxpose.xlu0.b32.cont [7/16] 0.0, 128
        %521 = vxpose.xlu0.b32.cont [8/16] 0.0, 128
        %522 = vxpose.xlu0.b32.cont [9/16] 0.0, 128
        %523 = vxpose.xlu0.b32.cont [10/16] 0.0, 128
        %524 = vxpose.xlu0.b32.cont [11/16] 0.0, 128
        %525 = vxpose.xlu0.b32.cont [12/16] 0.0, 128
        %526 = vxpose.xlu0.b32.cont [13/16] 0.0, 128
        %527 = vxpose.xlu0.b32.cont [14/16] 0.0, 128
        %528 = vxpose.xlu0.b32.cont [15/16] 0.0, 128
        %529 = vxpose.xlu0.b32.end [16/16] 0.0, 128
        %v530 = vpop.trf.xlu0
        %v531 = vpop.trf.xlu0
        %v532 = vpop.trf.xlu0
        %v533 = vpop.trf.xlu0
        %v534 = vpop.trf.xlu0
        %v535 = vpop.trf.xlu0
        %v536 = vpop.trf.xlu0
        %v537 = vpop.trf.xlu0
        %v538 = vpop.trf.xlu0
        %v539 = vpop.trf.xlu0
        %v540 = vpop.trf.xlu0
        %v541 = vpop.trf.xlu0
        %v542 = vpop.trf.xlu0
        %v543 = vpop.trf.xlu0
        %v544 = vpop.trf.xlu0
        %v545 = vpop.trf.xlu0
        %548 = vrot.lane.b32.xlu0 %v509, 112
        %v549 = vpop.permute.xlu0 %548
        %550 = vrot.lane.b32.xlu0 %v512, 112
        %v551 = vpop.permute.xlu0 %550
        %554 = vxpose.xlu0.b32.start [1/16] %v549, 128
        %555 = vxpose.xlu0.b32.cont [2/16] %v551, 128
        %556 = vxpose.xlu0.b32.cont [3/16] 0.0, 128
        %557 = vxpose.xlu0.b32.cont [4/16] 0.0, 128
        %558 = vxpose.xlu0.b32.cont [5/16] 0.0, 128
        %559 = vxpose.xlu0.b32.cont [6/16] 0.0, 128
        %560 = vxpose.xlu0.b32.cont [7/16] 0.0, 128
        %561 = vxpose.xlu0.b32.cont [8/16] 0.0, 128
        %562 = vxpose.xlu0.b32.cont [9/16] 0.0, 128
        %563 = vxpose.xlu0.b32.cont [10/16] 0.0, 128
        %564 = vxpose.xlu0.b32.cont [11/16] 0.0, 128
        %565 = vxpose.xlu0.b32.cont [12/16] 0.0, 128
        %566 = vxpose.xlu0.b32.cont [13/16] 0.0, 128
        %567 = vxpose.xlu0.b32.cont [14/16] 0.0, 128
        %568 = vxpose.xlu0.b32.cont [15/16] 0.0, 128
        %569 = vxpose.xlu0.b32.end [16/16] 0.0, 128
        %v570 = vpop.trf.xlu0
        %v571 = vpop.trf.xlu0
        %v572 = vpop.trf.xlu0
        %v573 = vpop.trf.xlu0
        %v574 = vpop.trf.xlu0
        %v575 = vpop.trf.xlu0
        %v576 = vpop.trf.xlu0
        %v577 = vpop.trf.xlu0
        %v578 = vpop.trf.xlu0
        %v579 = vpop.trf.xlu0
        %v580 = vpop.trf.xlu0
        %v581 = vpop.trf.xlu0
        %v582 = vpop.trf.xlu0
        %v583 = vpop.trf.xlu0
        %v584 = vpop.trf.xlu0
        %v585 = vpop.trf.xlu0
        %588 = vrot.lane.b32.xlu0 %v570, 16
        %v589 = vpop.permute.xlu0 %588
        %590 = vrot.lane.b32.xlu0 %v571, 16
        %v591 = vpop.permute.xlu0 %590
        %v594 = vsel %vm364, %v530, %v589
        %v595 = vsel %vm364, %v531, %v591
        %v597 = vsel %vm370, %v594, 0
        %v600 = vsel %vm370, %v595, 0
        %602 = vmatpush.msra.mxu0 0.0
        %603 = vmatpush.msra.mxu0 0.0
        %604 = vmatpush.msra.mxu0 0.0
        %605 = vmatpush.msra.mxu0 0.0
        %606 = vmatpush.msra.mxu0 0.0
        %607 = vmatpush.msra.mxu0 0.0
        %608 = vmatpush.msra.mxu0 0.0
        %609 = vmatpush.msra.mxu0 0.0
        %610 = vmatpush.msra.mxu0 0.0
        %611 = vmatpush.msra.mxu0 0.0
        %612 = vmatpush.msra.mxu0 0.0
        %613 = vmatpush.msra.mxu0 0.0
        %614 = vmatpush.msra.mxu0 %v345
        %615 = vmatpush.msra.mxu0 %v344
        %616 = vmatpush.msra.mxu0 %v343
        %617 = vmatpush.msra.mxu0 %v342
        %618 = vmatmul.f32.gmra.mxu0 %v597
        %v619 = vpop.f32.mrf.mxu0
        %v620 = vadd.f32 %v368, %v619
        %621 = vmatmul.f32.gmra.mxu0 %v600
        %v622 = vpop.f32.mrf.mxu0
        %v623 = vadd.f32 %v368, %v622
        %624 = vdwg.mxu0
        %625 = vxpose.xlu0.b32.start [1/16] %v620, 128
        %626 = vxpose.xlu0.b32.cont [2/16] %v623, 128
        %627 = vxpose.xlu0.b32.cont [3/16] 0.0, 128
        %628 = vxpose.xlu0.b32.cont [4/16] 0.0, 128
        %629 = vxpose.xlu0.b32.cont [5/16] 0.0, 128
        %630 = vxpose.xlu0.b32.cont [6/16] 0.0, 128
        %631 = vxpose.xlu0.b32.cont [7/16] 0.0, 128
        %632 = vxpose.xlu0.b32.cont [8/16] 0.0, 128
        %633 = vxpose.xlu0.b32.cont [9/16] 0.0, 128
        %634 = vxpose.xlu0.b32.cont [10/16] 0.0, 128
        %635 = vxpose.xlu0.b32.cont [11/16] 0.0, 128
        %636 = vxpose.xlu0.b32.cont [12/16] 0.0, 128
        %637 = vxpose.xlu0.b32.cont [13/16] 0.0, 128
        %638 = vxpose.xlu0.b32.cont [14/16] 0.0, 128
        %639 = vxpose.xlu0.b32.cont [15/16] 0.0, 128
        %640 = vxpose.xlu0.b32.end [16/16] 0.0, 128
        %v641 = vpop.trf.xlu0
        %v642 = vpop.trf.xlu0
        %v643 = vpop.trf.xlu0
        %v644 = vpop.trf.xlu0
        %v645 = vpop.trf.xlu0
        %v646 = vpop.trf.xlu0
        %v647 = vpop.trf.xlu0
        %v648 = vpop.trf.xlu0
        %v649 = vpop.trf.xlu0
        %v650 = vpop.trf.xlu0
        %v651 = vpop.trf.xlu0
        %v652 = vpop.trf.xlu0
        %v653 = vpop.trf.xlu0
        %v654 = vpop.trf.xlu0
        %v655 = vpop.trf.xlu0
        %v656 = vpop.trf.xlu0
        %659 = vrot.lane.b32.xlu0 %v620, 112
        %v660 = vpop.permute.xlu0 %659
        %661 = vrot.lane.b32.xlu0 %v623, 112
        %v662 = vpop.permute.xlu0 %661
        %665 = vxpose.xlu0.b32.start [1/16] %v660, 128
        %666 = vxpose.xlu0.b32.cont [2/16] %v662, 128
        %667 = vxpose.xlu0.b32.cont [3/16] 0.0, 128
        %668 = vxpose.xlu0.b32.cont [4/16] 0.0, 128
        %669 = vxpose.xlu0.b32.cont [5/16] 0.0, 128
        %670 = vxpose.xlu0.b32.cont [6/16] 0.0, 128
        %671 = vxpose.xlu0.b32.cont [7/16] 0.0, 128
        %672 = vxpose.xlu0.b32.cont [8/16] 0.0, 128
        %673 = vxpose.xlu0.b32.cont [9/16] 0.0, 128
        %674 = vxpose.xlu0.b32.cont [10/16] 0.0, 128
        %675 = vxpose.xlu0.b32.cont [11/16] 0.0, 128
        %676 = vxpose.xlu0.b32.cont [12/16] 0.0, 128
        %677 = vxpose.xlu0.b32.cont [13/16] 0.0, 128
        %678 = vxpose.xlu0.b32.cont [14/16] 0.0, 128
        %679 = vxpose.xlu0.b32.cont [15/16] 0.0, 128
        %680 = vxpose.xlu0.b32.end [16/16] 0.0, 128
        %v681 = vpop.trf.xlu0
        %v682 = vpop.trf.xlu0
        %v683 = vpop.trf.xlu0
        %v684 = vpop.trf.xlu0
        %v685 = vpop.trf.xlu0
        %v686 = vpop.trf.xlu0
        %v687 = vpop.trf.xlu0
        %v688 = vpop.trf.xlu0
        %v689 = vpop.trf.xlu0
        %v690 = vpop.trf.xlu0
        %v691 = vpop.trf.xlu0
        %v692 = vpop.trf.xlu0
        %v693 = vpop.trf.xlu0
        %v694 = vpop.trf.xlu0
        %v695 = vpop.trf.xlu0
        %v696 = vpop.trf.xlu0
        %699 = vrot.lane.b32.xlu0 %v681, 16
        %v700 = vpop.permute.xlu0 %699
        %701 = vrot.lane.b32.xlu0 %v682, 16
        %v702 = vpop.permute.xlu0 %701
        %v705 = vsel %vm364, %v641, %v700
        %v706 = vsel %vm364, %v642, %v702
        %s707 = sld [smem:[#allocation2]]
        %v708 = vstv %s707
        %v710 = vsel %vm370, %v705, 0
        %v713 = vsel %vm370, %v706, 0
        %715 = vmatpush.msra.mxu0 0.0
        %716 = vmatpush.msra.mxu0 0.0
        %717 = vmatpush.msra.mxu0 0.0
        %718 = vmatpush.msra.mxu0 0.0
        %719 = vmatpush.msra.mxu0 0.0
        %720 = vmatpush.msra.mxu0 0.0
        %721 = vmatpush.msra.mxu0 0.0
        %722 = vmatpush.msra.mxu0 0.0
        %723 = vmatpush.msra.mxu0 0.0
        %724 = vmatpush.msra.mxu0 0.0
        %725 = vmatpush.msra.mxu0 0.0
        %726 = vmatpush.msra.mxu0 0.0
        %727 = vmatpush.msra.mxu0 %v353
        %728 = vmatpush.msra.mxu0 %v352
        %729 = vmatpush.msra.mxu0 %v351
        %730 = vmatpush.msra.mxu0 %v350
        %731 = vmatmul.f32.gmra.mxu0 %v710
        %v732 = vpop.f32.mrf.mxu0
        %v733 = vadd.f32 %v708, %v732
        %734 = vmatmul.f32.gmra.mxu0 %v713
        %v735 = vpop.f32.mrf.mxu0
        %v736 = vadd.f32 %v708, %v735
        %737 = vdwg.mxu0
        %v738 = vsub.f32 0.0, %v733
        %v739 = vsub.f32 0.0, %v736
        %v740 = vmul.f32 %v738, 1.442695
        %v741 = vpow.pop %v740
        %v742 = vmul.f32 %v739, 1.442695
        %v743 = vpow.pop %v742
        %v744 = vadd.f32 %v741, 1.0
        %v745 = vadd.f32 %v743, 1.0
        %v746 = vrcp.pop %v744
        %v747 = vrcp.pop %v745
        %748 = vxpose.xlu0.b32.start [1/16] %v746, 128
        %749 = vxpose.xlu0.b32.cont [2/16] %v747, 128
        %750 = vxpose.xlu0.b32.cont [3/16] 0.0, 128
        %751 = vxpose.xlu0.b32.cont [4/16] 0.0, 128
        %752 = vxpose.xlu0.b32.cont [5/16] 0.0, 128
        %753 = vxpose.xlu0.b32.cont [6/16] 0.0, 128
        %754 = vxpose.xlu0.b32.cont [7/16] 0.0, 128
        %755 = vxpose.xlu0.b32.cont [8/16] 0.0, 128
        %756 = vxpose.xlu0.b32.cont [9/16] 0.0, 128
        %757 = vxpose.xlu0.b32.cont [10/16] 0.0, 128
        %758 = vxpose.xlu0.b32.cont [11/16] 0.0, 128
        %759 = vxpose.xlu0.b32.cont [12/16] 0.0, 128
        %760 = vxpose.xlu0.b32.cont [13/16] 0.0, 128
        %761 = vxpose.xlu0.b32.cont [14/16] 0.0, 128
        %762 = vxpose.xlu0.b32.cont [15/16] 0.0, 128
        %763 = vxpose.xlu0.b32.end [16/16] 0.0, 128
        %v764 = vpop.trf.xlu0
        %v765 = vpop.trf.xlu0
        %v766 = vpop.trf.xlu0
        %v767 = vpop.trf.xlu0
        %v768 = vpop.trf.xlu0
        %v769 = vpop.trf.xlu0
        %v770 = vpop.trf.xlu0
        %v771 = vpop.trf.xlu0
        %v772 = vpop.trf.xlu0
        %v773 = vpop.trf.xlu0
        %v774 = vpop.trf.xlu0
        %v775 = vpop.trf.xlu0
        %v776 = vpop.trf.xlu0
        %v777 = vpop.trf.xlu0
        %v778 = vpop.trf.xlu0
        %v779 = vpop.trf.xlu0
        %780 = vst.msk [vmem:[%s316] sm:$0xff] %vm364, %v764
        %781 = vst.msk [vmem:[%s316 + $0x8] sm:$0xff] %vm364, %v765
        %s782 = sand.u32 %s186, 1
        %s783 = scalar_lea.sflag [#allocation5], %s782
        %s784 = sand.u32 %s186, 1
        %s785 = smul.addr %s784, 16
        %s786 = scalar_lea.vmem [#allocation8], %s785
        // Predicated region
        $region57: #{tpu_custom_call.1} parent=47 // pred_check
          %p787 = pneg %p196
        $region58: #{tpu_custom_call.1} parent=47 // pred_check_branch
          %789 = sbr.rel (%p787) target = $region60
        $region59: #{tpu_custom_call.1} parent=47 // pred_region
          %791 = vsyncadd %s783, 0
          %s792 = smul.addr %s26, 2
          %s793 = smul.addr %s792, 8
          %s794 = scalar_lea.hbm %s7, %s793
          %s795 = sshll.u32 %s786, 4
          %s796 = int_to_ptr.vmem [resolvable:$true] %s795
          %s797 = sshll.u32 %s794, 4
          %s798 = int_to_ptr.hbm [resolvable:$true] %s797
          %803 = dma.vmem_to_hbm [thread:$0]  %s796, 256, %s798, %s783, 128, 128, 8
        $region60: #{tpu_custom_call.1} parent=47 // pred_fallthru
          _
      $region48: #{tpu_custom_call.1} parent=5 // pred_fallthru
        _
      %p804 = scmp.le.s32.totalorder 2, %s21
      // Predicated region
      $region61: #{tpu_custom_call.1} parent=5 // pred_check
        %p805 = pneg %p804
      $region62: #{tpu_custom_call.1} parent=5 // pred_check_branch
        %807 = sbr.rel (%p805) target = $region64
      $region63: #{tpu_custom_call.1} parent=5 // pred_region
        %s808 = ssub.s32 %s21, 2
        // Predicated region
        $region65: #{tpu_custom_call.1} parent=63 // pred_check
          %p809 = pneg %p202
        $region66: #{tpu_custom_call.1} parent=63 // pred_check_branch
          %811 = sbr.rel (%p809) target = $region68
        $region67: #{tpu_custom_call.1} parent=63 // pred_region
          %s812 = sand.u32 %s187, 1
          %s813 = scalar_lea.sflag [#allocation5], %s812
          %s814 = sand.u32 %s187, 1
          %s815 = smul.addr %s814, 16
          %s816 = scalar_lea.vmem [#allocation8], %s815
          %818 = dma.done %s813, 256
        $region68: #{tpu_custom_call.1} parent=63 // pred_fallthru
          _
      $region64: #{tpu_custom_call.1} parent=5 // pred_fallthru
        _
    $region6: #{tpu_custom_call.1} parent=1 // loop_footer
      %s25 = sadd.s32 1, %s21
    $region7: #{tpu_custom_call.1} parent=1 // loop_footer_branch
      %20 = sbr.rel target = $region3
    $region8: #{tpu_custom_call.1} parent=1 // loop_exit
      _
    %819 = vsyncpa [#allocation4], 1
    %s820 = scalar_lea.sflag [#allocation4], 1
    %821 = vsyncpa %s820, 1
    %822 = vsyncpa [#allocation7], 1
    %823 = vsyncpa [#allocation5], 1
    %s824 = scalar_lea.sflag [#allocation5], 1
    %825 = vsyncpa %s824, 1

</llo_original>
